<compile_context>
chip_gen: v6e
topology: v6e:2x2x1
jax: 0.10.0
libtpu: 0.0.40
codegen_flags: <defaults>
</compile_context>

<pallas_src>
import jax
import jax.numpy as jnp
from jax.experimental import pallas as pl
from jax.experimental.pallas import tpu as pltpu


def _normalized_model_kernel(x_ref, w_ref, b_ref, o_ref):
    # x_ref: (Bn, C, T)   image tile (any dtype), spatial dims flattened
    # w_ref: (K, C)       normalization-folded 1x1-conv weight  (w / std)
    # b_ref: (K, 1)       normalization-folded bias             (b - w' @ mean)
    # o_ref: (Bn, K, T)
    x = x_ref[...].astype(jnp.float32)        # in-register cast, native-width DMA
    w = w_ref[...]
    b = b_ref[...]
    _, c_dim, _ = x.shape

    # Bias folded into the first channel FMA (no separate broadcast-fill pass),
    # remaining channels as broadcast-scaled VPU FMAs. C=3 contraction would
    # only pad/waste the MXU; this kernel is HBM-bound on v5e/v6e.
    y = w[:, 0:1][None, :, :] * x[:, 0:1, :] + b[None, :, :]   # (Bn, K, T)
    for c in range(1, c_dim):                 # static, unrolled (C = 3)
        y = y + w[:, c:c + 1][None, :, :] * x[:, c:c + 1, :]

    # Lane-dense store (T multiple of 128 for all but tiny inputs, K = 8).
    o_ref[...] = y.astype(o_ref.dtype)


def _cdiv(a, b):
    return -(-a // b)


def _pick_spatial_tile(hw, *, lane=128, max_t=16384, min_t=2048):
    """Largest lane-aligned spatial tile <= max_t that (nearly) divides HW."""
    if hw <= max_t:
        return hw                              # single tile == full dim (legal)
    lanes = _cdiv(hw, lane)
    best = 1
    for d in range(1, max_t // lane + 1):      # trace-time Python, <=128 iters
        if lanes % d == 0:
            best = d
    t = best * lane
    if t < min_t:                              # degenerate (e.g. prime lane count)
        t = max_t                              # ragged last tile, masked by Pallas
    return t


def normalized_model_forward(x_nchw, mean, std, w, b, *, out_dtype=jnp.float32):
    """x_nchw: (N, 3, H, W). mean/std: (3,). w: (K, 3). b: (K,).

    out_dtype=jnp.bfloat16 roughly halves HBM write traffic if the consumer
    allows it (recommended for bandwidth-bound deployments).
    """
    N, C, H, W = x_nchw.shape
    K = w.shape[0]
    HW = H * W

    # --- Fold normalization into the 1x1-conv parameters (wrapper-side, tiny).
    #   y = w @ ((x - mean)/std) + b = (w * (1/std)) @ x + (b - (w/std) @ mean)
    inv_std = 1.0 / std.astype(jnp.float32)
    w_eff = w.astype(jnp.float32) * inv_std[None, :]                 # (K, C)
    b_eff = b.astype(jnp.float32) - w_eff @ mean.astype(jnp.float32)
    b_col = b_eff.reshape(K, 1)

    # --- Tiling.
    T_HW = _pick_spatial_tile(HW)
    num_hw_tiles = _cdiv(HW, T_HW)

    x_itemsize = jnp.dtype(x_nchw.dtype).itemsize
    out_itemsize = jnp.dtype(out_dtype).itemsize

    # VMEM accounting with sublane padding: the (Bn, C=3, T) input block lands
    # in (8,128) tiles -> ~32*T bytes/image for any <=32-bit dtype; the
    # (Bn, K=8, T) output block is 8*T*out_itemsize. Double-buffered, keep
    # under a 24 MiB budget (scoped limit 32 MiB; safe on v5e/v6e/v7x).
    VMEM_BUDGET = 24 * 1024 * 1024
    per_image_vmem = 32 * T_HW + 8 * T_HW * out_itemsize
    Bn = max(1, min(N, VMEM_BUDGET // (2 * per_image_vmem)))

    # Prefer >=2 total grid steps (2 TensorCores on v7x) by splitting the
    # spatial axis — never by shrinking Bn (keeps per-step DMAs large). Tiny
    # inputs that can't split just run as a single step.
    if _cdiv(N, Bn) * num_hw_tiles < 2 and T_HW % 256 == 0:
        T_HW //= 2
        num_hw_tiles = _cdiv(HW, T_HW)

    grid = (_cdiv(N, Bn), num_hw_tiles)

    # Free metadata reshape (contiguous trailing dims merge); no dtype cast.
    x_flat = x_nchw.reshape(N, C, HW)

    cost = pl.CostEstimate(
        flops=2 * N * HW * C * K,
        transcendentals=0,
        bytes_accessed=N * HW * (C * x_itemsize + K * out_itemsize),
    )

    out_flat = pl.pallas_call(
        _normalized_model_kernel,
        out_shape=jax.ShapeDtypeStruct((N, K, HW), out_dtype),
        grid_spec=pltpu.PrefetchScalarGridSpec(
            num_scalar_prefetch=0,
            grid=grid,
            in_specs=[
                pl.BlockSpec((Bn, C, T_HW), lambda n, t: (n, 0, t)),
                # Constant-index tiny params: fetched once, reused every step.
                pl.BlockSpec((K, C), lambda n, t: (0, 0)),
                pl.BlockSpec((K, 1), lambda n, t: (0, 0)),
            ],
            out_specs=pl.BlockSpec((Bn, K, T_HW), lambda n, t: (n, 0, t)),
        ),
        compiler_params=pltpu.CompilerParams(
            dimension_semantics=("parallel", "parallel"),
            vmem_limit_bytes=32 * 1024 * 1024,
        ),
        cost_estimate=cost,
    )(x_flat, w_eff, b_col)

    return out_flat.reshape(N, K, H, W)


def _reference(x_nchw, mean, std, w, b):
    normed = (x_nchw.astype(jnp.float32) - mean.reshape(1, 3, 1, 1)) / std.reshape(1, 3, 1, 1)
    return jnp.einsum("kc,nchw->nkhw", w, normed) + b.reshape(1, -1, 1, 1)


if __name__ == "__main__":
    key = jax.random.PRNGKey(0)
    kx, kw, kb, kx2 = jax.random.split(key, 4)

    N, C, H, W = 2, 3, 16, 16     # mean/std are per-RGB-channel => C must be 3
    K = 8                          # stand-in model output channels

    x = jax.random.uniform(kx, (N, C, H, W), dtype=jnp.float32)

    # Deterministic normalization constants (ImageNet-style).
    mean = jnp.array([0.485, 0.456, 0.406], dtype=jnp.float32)
    std = jnp.array([0.229, 0.224, 0.225], dtype=jnp.float32)

    # Deterministic stand-in model parameters.
    w = jax.random.normal(kw, (K, C), dtype=jnp.float32) * 0.1
    b = jax.random.normal(kb, (K,), dtype=jnp.float32) * 0.01

    ref = _reference(x, mean, std, w, b)

    # f32 output path.
    out = normalized_model_forward(x, mean, std, w, b)
    out = jax.block_until_ready(out)
    assert out.shape == (N, K, H, W)
    assert jnp.allclose(out, ref, atol=1e-5, rtol=1e-5), "mismatch vs reference"

    # bf16 output path (halves HBM write traffic; loose tolerance).
    out_bf16 = normalized_model_forward(x, mean, std, w, b,
                                        out_dtype=jnp.bfloat16)
    out_bf16 = jax.block_until_ready(out_bf16)
    assert out_bf16.shape == (N, K, H, W)
    assert out_bf16.dtype == jnp.bfloat16
    assert jnp.allclose(out_bf16.astype(jnp.float32), ref,
                        atol=2e-2, rtol=2e-2), "bf16 mismatch vs reference"

    # Ragged spatial size (HW not a multiple of 128): no pre-pad / post-slice,
    # boundary handled by Pallas masked stores.
    x2 = jax.random.uniform(kx2, (3, C, 15, 15), dtype=jnp.float32)
    ref2 = _reference(x2, mean, std, w, b)
    out2 = jax.block_until_ready(normalized_model_forward(x2, mean, std, w, b))
    assert out2.shape == (3, K, 15, 15)
    assert jnp.allclose(out2, ref2, atol=1e-5, rtol=1e-5), "ragged mismatch"

    print("KERNEL_OK")
</pallas_src>

<mosaic_0001>
module attributes {stable_mosaic.version = 11 : i64} {
  func.func @_normalized_model_kernel(%arg0: i32, %arg1: i32, %arg2: memref<2x3x128xf32, #tpu.memory_space<vmem>>, %arg3: memref<8x3xf32, #tpu.memory_space<vmem>>, %arg4: memref<8x1xf32, #tpu.memory_space<vmem>>, %arg5: memref<2x8x128xf32, #tpu.memory_space<vmem>>) attributes {dimension_semantics = [#tpu.dimension_semantics<parallel>, #tpu.dimension_semantics<parallel>], iteration_bounds = array<i64: 1, 2>, scalar_prefetch = 0 : i64, scratch_operands = 0 : i64, tpu.core_type = #tpu.core_type<tc>, window_params = [{transform_indices = @transform_0, window_bounds = array<i64: 2, 3, 128>}, {pipeline_mode = #tpu.pipeline_mode<synchronous>, transform_indices = @transform_1, window_bounds = array<i64: 8, 3>}, {pipeline_mode = #tpu.pipeline_mode<synchronous>, transform_indices = @transform_2, window_bounds = array<i64: 8, 1>}, {transform_indices = @transform_3, window_bounds = array<i64: 2, 8, 128>}]} {
    %c0 = arith.constant 0 : index
    %c0_0 = arith.constant 0 : index
    %c0_1 = arith.constant 0 : index
    %0 = vector.load %arg2[%c0, %c0_0, %c0_1] : memref<2x3x128xf32, #tpu.memory_space<vmem>>, vector<2x3x128xf32>
    %c0_2 = arith.constant 0 : index
    %c0_3 = arith.constant 0 : index
    %1 = vector.load %arg3[%c0_2, %c0_3] : memref<8x3xf32, #tpu.memory_space<vmem>>, vector<8x3xf32>
    %c0_4 = arith.constant 0 : index
    %c0_5 = arith.constant 0 : index
    %2 = vector.load %arg4[%c0_4, %c0_5] : memref<8x1xf32, #tpu.memory_space<vmem>>, vector<8x1xf32>
    %3 = vector.extract_strided_slice %1 {offsets = [0, 0], sizes = [8, 1], strides = [1, 1]} : vector<8x3xf32> to vector<8x1xf32>
    %4 = vector.shape_cast %3 : vector<8x1xf32> to vector<1x8x1xf32>
    %5 = vector.extract_strided_slice %0 {offsets = [0, 0, 0], sizes = [2, 1, 128], strides = [1, 1, 1]} : vector<2x3x128xf32> to vector<2x1x128xf32>
    %6 = vector.broadcast %4 : vector<1x8x1xf32> to vector<2x8x128xf32>
    %7 = vector.broadcast %5 : vector<2x1x128xf32> to vector<2x8x128xf32>
    %8 = arith.mulf %6, %7 : vector<2x8x128xf32>
    %9 = vector.shape_cast %2 : vector<8x1xf32> to vector<1x8x1xf32>
    %10 = vector.broadcast %9 : vector<1x8x1xf32> to vector<2x8x128xf32>
    %11 = arith.addf %8, %10 : vector<2x8x128xf32>
    %12 = vector.extract_strided_slice %1 {offsets = [0, 1], sizes = [8, 1], strides = [1, 1]} : vector<8x3xf32> to vector<8x1xf32>
    %13 = vector.shape_cast %12 : vector<8x1xf32> to vector<1x8x1xf32>
    %14 = vector.extract_strided_slice %0 {offsets = [0, 1, 0], sizes = [2, 1, 128], strides = [1, 1, 1]} : vector<2x3x128xf32> to vector<2x1x128xf32>
    %15 = vector.broadcast %13 : vector<1x8x1xf32> to vector<2x8x128xf32>
    %16 = vector.broadcast %14 : vector<2x1x128xf32> to vector<2x8x128xf32>
    %17 = arith.mulf %15, %16 : vector<2x8x128xf32>
    %18 = arith.addf %11, %17 : vector<2x8x128xf32>
    %19 = vector.extract_strided_slice %1 {offsets = [0, 2], sizes = [8, 1], strides = [1, 1]} : vector<8x3xf32> to vector<8x1xf32>
    %20 = vector.shape_cast %19 : vector<8x1xf32> to vector<1x8x1xf32>
    %21 = vector.extract_strided_slice %0 {offsets = [0, 2, 0], sizes = [2, 1, 128], strides = [1, 1, 1]} : vector<2x3x128xf32> to vector<2x1x128xf32>
    %22 = vector.broadcast %20 : vector<1x8x1xf32> to vector<2x8x128xf32>
    %23 = vector.broadcast %21 : vector<2x1x128xf32> to vector<2x8x128xf32>
    %24 = arith.mulf %22, %23 : vector<2x8x128xf32>
    %25 = arith.addf %18, %24 : vector<2x8x128xf32>
    %c0_6 = arith.constant 0 : index
    %c0_7 = arith.constant 0 : index
    %c0_8 = arith.constant 0 : index
    %26 = vector.load %arg5[%c0_6, %c0_7, %c0_8] : memref<2x8x128xf32, #tpu.memory_space<vmem>>, vector<2x8x128xf32>
    tpu.vector_store %arg5[%c0_6, %c0_7, %c0_8], %25 {strides = array<i32>} : memref<2x8x128xf32, #tpu.memory_space<vmem>>, vector<2x8x128xf32>,
    return
  }
  func.func @transform_0(%arg0: i32, %arg1: i32) -> (i32, i32, i32) {
    %c0_i32 = arith.constant 0 : i32
    %c0_i32_0 = arith.constant 0 : i32
    return %arg0, %c0_i32, %arg1 : i32, i32, i32
  }
  func.func @transform_1(%arg0: i32, %arg1: i32) -> (i32, i32) {
    %c0_i32 = arith.constant 0 : i32
    %c0_i32_0 = arith.constant 0 : i32
    %c0_i32_1 = arith.constant 0 : i32
    return %c0_i32, %c0_i32_0 : i32, i32
  }
  func.func @transform_2(%arg0: i32, %arg1: i32) -> (i32, i32) {
    %c0_i32 = arith.constant 0 : i32
    %c0_i32_0 = arith.constant 0 : i32
    %c0_i32_1 = arith.constant 0 : i32
    return %c0_i32, %c0_i32_0 : i32, i32
  }
  func.func @transform_3(%arg0: i32, %arg1: i32) -> (i32, i32, i32) {
    %c0_i32 = arith.constant 0 : i32
    %c0_i32_0 = arith.constant 0 : i32
    return %arg0, %c0_i32, %arg1 : i32, i32, i32
  }
}

</mosaic_0001>

<llo_original>
// kernel: tpu_custom_call.1
$region0: #{tpu_custom_call.1}
  #allocation0 [shape = 'u32[]', space=smem, size = 0x4, offset = 0x4, fixed_abs, tag = 'smem constant byte address 0x4 - core index']
  #allocation1 [shape = 'u32[144,128]{1,0:T(1,128)}', space=vmem, size = 0x12000, scoped, tag = 'internal scratch']
  %s0 = inlined_call_operand.vmem [shape: f32[2,3,256], index: 0, kind: input, shape index: {}]
  %s1 = inlined_call_operand.vmem [shape: f32[8,3], index: 1, kind: input, shape index: {}]
  %s2 = inlined_call_operand.vmem [shape: f32[8,1], index: 2, kind: input, shape index: {}]
  %s3 = inlined_call_operand.hbm [shape: f32[2,8,256], index: 3, kind: output, shape index: {}]
  %s4 = sld [smem:[#allocation0]]
  $region86: #{tpu_custom_call.1} parent=0
    _
  %s6 = ssub.s32 1, %s4
  %s7 = scalar_select 0, %s6, %s4
  $region1: #{tpu_custom_call.1} parent=0
    #allocation2 [shape = 'u8[8192]{0}', space=vmem, size = 0x2000, scoped, tag = 'input window, operand 0']
    #allocation3 [shape = 'u8[16384]{0}', space=vmem, size = 0x4000, scoped, tag = 'output window, operand 0']
    #allocation4 [shape = 's32[2]{0}', space=sflag, size = 0x8, scoped, tag = 'scoped memory for tpu_custom_call.1']
    %8 = vsyncpa [#allocation4], 0
    %s9 = scalar_lea.sflag [#allocation4], 1
    %10 = vsyncpa %s9, 0
    loop: start=0, step=1, limit=4
    $region2: #{tpu_custom_call.1} parent=1 // loop_pre_header
      _
    $region3: #{tpu_custom_call.1} parent=1 // loop_header
      %s12 = sphi 0, %s16
      %p13 = scmp.ge.s32.totalorder %s12, 4
      %s19 = sphi 0, %s31
      %s20 = sphi 0, %s27
      %s21 = sphi 0, %s19
      %s22 = sphi 0, %s20
      %s23 = sphi 0, %s21
      %s24 = sphi 0, %s22
      %s36 = sphi 0, %s38
      %s39 = sphi 0, %s36
      %s40 = sphi 0, %s39
      %s56 = sphi 0, %s40
      %s60 = sphi 0, %s60
      %s62 = sphi 0, %s60
      %s63 = sphi 0, %s62
      %s77 = sphi 0, %s63
      %s81 = sphi 0, %s81
      %s83 = sphi 0, %s81
      %s84 = sphi 0, %s83
      %s98 = sphi 0, %s84
      %s106 = sphi 0, %s108
      %s109 = sphi 0, %s106
      %s110 = sphi 0, %s109
      %s126 = sphi 0, %s110
    $region4: #{tpu_custom_call.1} parent=1 // loop_header_branch
      %15 = sbr.rel (%p13) target = $region8
    $region5: #{tpu_custom_call.1} parent=1 // loop_body
      %s17 = ssub.s32 %s12, 1
      %s18 = ssub.s32 %s12, 2
      %s25 = sadd.s32 1, %s20
      %p26 = scmp.ge.s32.totalorder %s25, 2
      %s27 = scalar_select %p26, 0, %s25
      %s28 = sadd.s32 1, %s19
      %s29 = scalar_select %p26, %s28, %s19
      %p30 = scmp.ge.s32.totalorder %s29, 1
      %s31 = scalar_select %p30, 0, %s29
      %s32 = ssub.s32 %s19, %s31
      %s33 = ssub.s32 %s20, %s27
      %s34 = sor.u32 %s32, %s33
      %p35 = scmp.eq.s32.totalorder %s34, 0
      %s37 = sadd.s32 %s36, 1
      %s38 = scalar_select %p35, %s36, %s37
      %p41 = pneg %p35
      %p42 = scmp.eq.s32.totalorder %s12, 1
      %p43 = por %p41, %p42
      %p44 = scmp.ne.s32.totalorder %s36, %s39
      %p45 = scmp.eq.s32.totalorder %s12, 0
      %p46 = por %p44, %p45
      %p47 = scmp.ne.s32.totalorder %s36, %s39
      %p48 = scmp.eq.s32.totalorder %s17, 1
      %p49 = por %p47, %p48
      %p50 = scmp.ne.s32.totalorder %s39, %s40
      %p51 = scmp.eq.s32.totalorder %s17, 0
      %p52 = por %p50, %p51
      %p53 = scmp.ne.s32.totalorder %s39, %s40
      %p54 = scmp.eq.s32.totalorder %s18, 1
      %p55 = por %p53, %p54
      %p57 = scmp.ne.s32.totalorder %s40, %s56
      %p58 = scmp.eq.s32.totalorder %s18, 0
      %p59 = por %p57, %p58
      %s61 = sadd.s32 %s60, 1
      %p64 = scmp.eq.s32.totalorder %s12, 1
      %p65 = scmp.ne.s32.totalorder %s60, %s62
      %p66 = scmp.eq.s32.totalorder %s12, 0
      %p67 = por %p65, %p66
      %p68 = scmp.ne.s32.totalorder %s60, %s62
      %p69 = scmp.eq.s32.totalorder %s17, 1
      %p70 = por %p68, %p69
      %p71 = scmp.ne.s32.totalorder %s62, %s63
      %p72 = scmp.eq.s32.totalorder %s17, 0
      %p73 = por %p71, %p72
      %p74 = scmp.ne.s32.totalorder %s62, %s63
      %p75 = scmp.eq.s32.totalorder %s18, 1
      %p76 = por %p74, %p75
      %p78 = scmp.ne.s32.totalorder %s63, %s77
      %p79 = scmp.eq.s32.totalorder %s18, 0
      %p80 = por %p78, %p79
      %s82 = sadd.s32 %s81, 1
      %p85 = scmp.eq.s32.totalorder %s12, 1
      %p86 = scmp.ne.s32.totalorder %s81, %s83
      %p87 = scmp.eq.s32.totalorder %s12, 0
      %p88 = por %p86, %p87
      %p89 = scmp.ne.s32.totalorder %s81, %s83
      %p90 = scmp.eq.s32.totalorder %s17, 1
      %p91 = por %p89, %p90
      %p92 = scmp.ne.s32.totalorder %s83, %s84
      %p93 = scmp.eq.s32.totalorder %s17, 0
      %p94 = por %p92, %p93
      %p95 = scmp.ne.s32.totalorder %s83, %s84
      %p96 = scmp.eq.s32.totalorder %s18, 1
      %p97 = por %p95, %p96
      %p99 = scmp.ne.s32.totalorder %s84, %s98
      %p100 = scmp.eq.s32.totalorder %s18, 0
      %p101 = por %p99, %p100
      %s102 = ssub.s32 %s19, %s31
      %s103 = ssub.s32 %s20, %s27
      %s104 = sor.u32 %s102, %s103
      %p105 = scmp.eq.s32.totalorder %s104, 0
      %s107 = sadd.s32 %s106, 1
      %s108 = scalar_select %p105, %s106, %s107
      %p111 = pneg %p105
      %p112 = scmp.eq.s32.totalorder %s12, 1
      %p113 = por %p111, %p112
      %p114 = scmp.ne.s32.totalorder %s106, %s109
      %p115 = scmp.eq.s32.totalorder %s12, 0
      %p116 = por %p114, %p115
      %p117 = scmp.ne.s32.totalorder %s106, %s109
      %p118 = scmp.eq.s32.totalorder %s17, 1
      %p119 = por %p117, %p118
      %p120 = scmp.ne.s32.totalorder %s109, %s110
      %p121 = scmp.eq.s32.totalorder %s17, 0
      %p122 = por %p120, %p121
      %p123 = scmp.ne.s32.totalorder %s109, %s110
      %p124 = scmp.eq.s32.totalorder %s18, 1
      %p125 = por %p123, %p124
      %p127 = scmp.ne.s32.totalorder %s110, %s126
      %p128 = scmp.eq.s32.totalorder %s18, 0
      %p129 = por %p127, %p128
      %p130 = scmp.le.s32.totalorder 1, %s12
      %p131 = scmp.lt.s32.totalorder %s12, 3
      %p132 = pnand %p130, %p131
      %p133 = pneg %p132
      // Predicated region
      $region9: #{tpu_custom_call.1} parent=5 // pred_check
        _
      $region10: #{tpu_custom_call.1} parent=5 // pred_check_branch
        %135 = sbr.rel (%p132) target = $region12
      $region11: #{tpu_custom_call.1} parent=5 // pred_region
        %s136 = ssub.s32 %s12, 1
        // Predicated region
        $region13: #{tpu_custom_call.1} parent=11 // pred_check
          %p137 = pneg %p73
        $region14: #{tpu_custom_call.1} parent=11 // pred_check_branch
          %139 = sbr.rel (%p137) target = $region16
        $region15: #{tpu_custom_call.1} parent=11 // pred_region
          _
        $region16: #{tpu_custom_call.1} parent=11 // pred_fallthru
          _
        // Predicated region
        $region17: #{tpu_custom_call.1} parent=11 // pred_check
          %p140 = pneg %p94
        $region18: #{tpu_custom_call.1} parent=11 // pred_check_branch
          %142 = sbr.rel (%p140) target = $region20
        $region19: #{tpu_custom_call.1} parent=11 // pred_region
          _
        $region20: #{tpu_custom_call.1} parent=11 // pred_fallthru
          _
      $region12: #{tpu_custom_call.1} parent=5 // pred_fallthru
        _
      %p143 = scmp.lt.s32.totalorder %s12, 2
      // Predicated region
      $region21: #{tpu_custom_call.1} parent=5 // pred_check
        %p144 = pneg %p143
      $region22: #{tpu_custom_call.1} parent=5 // pred_check_branch
        %146 = sbr.rel (%p144) target = $region24
      $region23: #{tpu_custom_call.1} parent=5 // pred_region
        // Predicated region
        $region25: #{tpu_custom_call.1} parent=23 // pred_check
          %p147 = pneg %p46
        $region26: #{tpu_custom_call.1} parent=23 // pred_check_branch
          %149 = sbr.rel (%p147) target = $region28
        $region27: #{tpu_custom_call.1} parent=23 // pred_region
          %s150 = sand.u32 %s36, 1
          %s151 = sand.u32 %s36, 1
          %s152 = smul.addr %s151, 8
          %s153 = scalar_lea.vmem [#allocation2], %s152
          %s154 = smul.u32 2, %s19
          %s155 = smul.addr %s154, 2
          %s156 = sadd.s32 %s20, %s155
          %s157 = smul.addr %s156, 4
          %s158 = scalar_lea.vmem %s0, %s157
          // Predicated region
          $region29: #{tpu_custom_call.1} parent=27 // pred_check
            _
          $region30: #{tpu_custom_call.1} parent=27 // pred_check_branch
            %160 = sbr.rel (0) target = $region32
          $region31: #{tpu_custom_call.1} parent=27 // pred_region
            // Predicated region
            $region33: #{tpu_custom_call.1} parent=31 // pred_check
              _
            $region34: #{tpu_custom_call.1} parent=31 // pred_check_branch
              %162 = sbr.rel target = $region36
            $region35: #{tpu_custom_call.1} parent=31 // pred_region
              // Predicated region
              $region48: #{tpu_custom_call.1} parent=35 // pred_check
                _
              $region49: #{tpu_custom_call.1} parent=35 // pred_check_branch
                %180 = sbr.rel (0) target = $region51
              $region50: #{tpu_custom_call.1} parent=35 // pred_region
                loop: start=0, step=1, limit=1
                $region52: #{tpu_custom_call.1} parent=50 // loop_pre_header
                  _
                $region53: #{tpu_custom_call.1} parent=50 // loop_header
                  %s182 = sphi 0, %s186
                  %p183 = scmp.ge.s32.totalorder %s182, 1
                  %s187 = sphi %s158, %s158
                  %s188 = sphi %s153, %s153
                $region54: #{tpu_custom_call.1} parent=50 // loop_header_branch
                  %185 = sbr.rel (%p183) target = $region58
                $region55: #{tpu_custom_call.1} parent=50 // loop_body
                  _
                $region56: #{tpu_custom_call.1} parent=50 // loop_footer
                  %s186 = sadd.s32 1, %s182
                $region57: #{tpu_custom_call.1} parent=50 // loop_footer_branch
                  %181 = sbr.rel target = $region53
                $region58: #{tpu_custom_call.1} parent=50 // loop_exit
                  _
                %s190 = ssub.s32 16, 1
                loop: start=0, step=1, limit=1
                $region59: #{tpu_custom_call.1} parent=50 // loop_pre_header
                  _
                $region60: #{tpu_custom_call.1} parent=50 // loop_header
                  %s192 = sphi 0, %s196
                  %p193 = scmp.ge.s32.totalorder %s192, 1
                  %s197 = sphi %s158, %s158
                  %s198 = sphi %s153, %s153
                $region61: #{tpu_custom_call.1} parent=50 // loop_header_branch
                  %195 = sbr.rel (%p193) target = $region65
                $region62: #{tpu_custom_call.1} parent=50 // loop_body
                  %v199 = vld [vmem:[%s197] sm:%s190]
                  %200 = vst [vmem:[%s198] sm:%s190] %v199
                  %v201 = vld [vmem:[%s197 + $0x8] sm:%s190]
                  %202 = vst [vmem:[%s198 + $0x4] sm:%s190] %v201
                $region63: #{tpu_custom_call.1} parent=50 // loop_footer
                  %s196 = sadd.s32 1, %s192
                $region64: #{tpu_custom_call.1} parent=50 // loop_footer_branch
                  %191 = sbr.rel target = $region60
                $region65: #{tpu_custom_call.1} parent=50 // loop_exit
                  _
              $region51: #{tpu_custom_call.1} parent=35 // pred_fallthru
                _
            $region36: #{tpu_custom_call.1} parent=31 // pred_fallthru
              _
            // Predicated region
            $region37: #{tpu_custom_call.1} parent=31 // pred_check
              _
            $region38: #{tpu_custom_call.1} parent=31 // pred_check_branch
              %164 = sbr.rel (0) target = $region40
            $region39: #{tpu_custom_call.1} parent=31 // pred_region
              %s166 = ssub.s32 16, 1
              loop: start=0, step=1, limit=1
              $region41: #{tpu_custom_call.1} parent=39 // loop_pre_header
                _
              $region42: #{tpu_custom_call.1} parent=39 // loop_header
                %s168 = sphi 0, %s172
                %p169 = scmp.ge.s32.totalorder %s168, 1
                %s173 = sphi %s158, %s158
                %s174 = sphi %s153, %s153
              $region43: #{tpu_custom_call.1} parent=39 // loop_header_branch
                %171 = sbr.rel (%p169) target = $region47
              $region44: #{tpu_custom_call.1} parent=39 // loop_body
                %v175 = vld [vmem:[%s173] sm:%s166]
                %176 = vst [vmem:[%s174] sm:%s166] %v175
                %v177 = vld [vmem:[%s173 + $0x8] sm:%s166]
                %178 = vst [vmem:[%s174 + $0x4] sm:%s166] %v177
              $region45: #{tpu_custom_call.1} parent=39 // loop_footer
                %s172 = sadd.s32 1, %s168
              $region46: #{tpu_custom_call.1} parent=39 // loop_footer_branch
                %167 = sbr.rel target = $region42
              $region47: #{tpu_custom_call.1} parent=39 // loop_exit
                _
            $region40: #{tpu_custom_call.1} parent=31 // pred_fallthru
              _
          $region32: #{tpu_custom_call.1} parent=27 // pred_fallthru
            _
          %203 = vnop
        $region28: #{tpu_custom_call.1} parent=23 // pred_fallthru
          _
      $region24: #{tpu_custom_call.1} parent=5 // pred_fallthru
        _
      %p204 = scmp.le.s32.totalorder 1, %s12
      %p205 = scmp.lt.s32.totalorder %s12, 3
      %p206 = pnand %p204, %p205
      %p207 = pneg %p206
      // Predicated region
      $region66: #{tpu_custom_call.1} parent=5 // pred_check
        _
      $region67: #{tpu_custom_call.1} parent=5 // pred_check_branch
        %209 = sbr.rel (%p206) target = $region69
      $region68: #{tpu_custom_call.1} parent=5 // pred_region
        %s210 = ssub.s32 %s12, 1
        %s211 = sand.u32 %s39, 1
        %s212 = sand.u32 %s39, 1
        %s213 = smul.addr %s212, 8
        %s214 = scalar_lea.vmem [#allocation2], %s213
        // Predicated region
        $region70: #{tpu_custom_call.1} parent=68 // pred_check
          %p215 = pneg %p52
        $region71: #{tpu_custom_call.1} parent=68 // pred_check_branch
          %217 = sbr.rel (%p215) target = $region73
        $region72: #{tpu_custom_call.1} parent=68 // pred_region
          _
        $region73: #{tpu_custom_call.1} parent=68 // pred_fallthru
          _
        %s218 = sand.u32 %s39, 1
        %s219 = sand.u32 %s39, 1
        %s220 = smul.addr %s219, 8
        %s221 = scalar_lea.vmem [#allocation2], %s220
        %p222 = pneg %p52
        %p223 = pneg %p49
        %p224 = pneg %p73
        %p225 = pneg %p70
        %p226 = pneg %p94
        %p227 = pneg %p91
        %p228 = pneg %p122
        %p229 = pneg %p119
        %s230 = sand.u32 %s109, 1
        %s231 = scalar_lea.sflag [#allocation4], %s230
        %s232 = sand.u32 %s109, 1
        %s233 = smul.addr %s232, 16
        %s234 = scalar_lea.vmem [#allocation3], %s233
        %s235 = smul.u32 2, %s21
        %s236 = smul.u32 2, %s21
        %v237 = vld [vmem:[%s214] sm:$0x7]
        %v238 = vld [vmem:[%s214 + $0x4] sm:$0x7]
        %v239 = vld [vmem:[%s1] sm:$0xff]
        %v240 = vld [vmem:[%s2] sm:$0xff]
        %242 = vset.pattern.permute.xlu0 0
        %243 = vperm.xlu0 %242, %v239
        %v244 = vpop.permute.xlu0 %243
        %v246 = vlaneseq
        %v247 = vshrl.u32 %v246, 7
        %v248 = vsub.s32 0, %v247
        %v249 = vrot.slane %v237, %v248
        %v250 = vlaneseq
        %v251 = vshrl.u32 %v250, 7
        %v252 = vsub.s32 0, %v251
        %v253 = vrot.slane %v238, %v252
        %v254 = vmul.f32 %v244, %v249
        %v255 = vmul.f32 %v244, %v253
        %257 = vset.pattern.permute.xlu0 0
        %258 = vperm.xlu0 %257, %v240
        %v259 = vpop.permute.xlu0 %258
        %v261 = vadd.f32 %v254, %v259
        %v262 = vadd.f32 %v255, %v259
        %263 = vset.pattern.permute.xlu0 1
        %264 = vperm.xlu0 %263, %v239
        %v265 = vpop.permute.xlu0 %264
        %v267 = vlaneseq
        %v268 = vshrl.u32 %v267, 7
        %v269 = vsub.s32 1, %v268
        %v270 = vrot.slane %v237, %v269
        %v271 = vlaneseq
        %v272 = vshrl.u32 %v271, 7
        %v273 = vsub.s32 1, %v272
        %v274 = vrot.slane %v238, %v273
        %v275 = vmul.f32 %v265, %v270
        %v276 = vmul.f32 %v265, %v274
        %v277 = vadd.f32 %v261, %v275
        %v278 = vadd.f32 %v262, %v276
        %279 = vset.pattern.permute.xlu0 2
        %280 = vperm.xlu0 %279, %v239
        %v281 = vpop.permute.xlu0 %280
        %v283 = vlaneseq
        %v284 = vshrl.u32 %v283, 7
        %v285 = vsub.s32 2, %v284
        %v286 = vrot.slane %v237, %v285
        %v287 = vlaneseq
        %v288 = vshrl.u32 %v287, 7
        %v289 = vsub.s32 2, %v288
        %v290 = vrot.slane %v238, %v289
        %v291 = vmul.f32 %v281, %v286
        %v292 = vmul.f32 %v281, %v290
        %v293 = vadd.f32 %v277, %v291
        %v294 = vadd.f32 %v278, %v292
        %295 = vst [vmem:[%s234] sm:$0xff] %v293
        %296 = vst [vmem:[%s234 + $0x8] sm:$0xff] %v294
        %s297 = sand.u32 %s109, 1
        %s298 = scalar_lea.sflag [#allocation4], %s297
        %s299 = sand.u32 %s109, 1
        %s300 = smul.addr %s299, 16
        %s301 = scalar_lea.vmem [#allocation3], %s300
        // Predicated region
        $region74: #{tpu_custom_call.1} parent=68 // pred_check
          %p302 = pneg %p119
        $region75: #{tpu_custom_call.1} parent=68 // pred_check_branch
          %304 = sbr.rel (%p302) target = $region77
        $region76: #{tpu_custom_call.1} parent=68 // pred_region
          %s305 = smul.u32 2, %s21
          %s307 = ssub.s32 256, 256
          %308 = vsyncadd %s298, %s307
          %s309 = smul.addr %s305, 2
          %s310 = sadd.s32 %s22, %s309
          %s311 = smul.addr %s310, 128
          %s312 = scalar_lea.hbm %s3, %s311
          %s313 = sshll.u32 %s301, 4
          %s314 = int_to_ptr.vmem [resolvable:$true] %s313
          %319 = dma.vmem_to_hbm [thread:$0]  %s314, 256, %s312, %s298, 128, 256, 8
        $region77: #{tpu_custom_call.1} parent=68 // pred_fallthru
          _
      $region69: #{tpu_custom_call.1} parent=5 // pred_fallthru
        _
      %p320 = scmp.le.s32.totalorder 2, %s12
      // Predicated region
      $region78: #{tpu_custom_call.1} parent=5 // pred_check
        %p321 = pneg %p320
      $region79: #{tpu_custom_call.1} parent=5 // pred_check_branch
        %323 = sbr.rel (%p321) target = $region81
      $region80: #{tpu_custom_call.1} parent=5 // pred_region
        %s324 = ssub.s32 %s12, 2
        // Predicated region
        $region82: #{tpu_custom_call.1} parent=80 // pred_check
          %p325 = pneg %p125
        $region83: #{tpu_custom_call.1} parent=80 // pred_check_branch
          %327 = sbr.rel (%p325) target = $region85
        $region84: #{tpu_custom_call.1} parent=80 // pred_region
          %s328 = sand.u32 %s110, 1
          %s329 = scalar_lea.sflag [#allocation4], %s328
          %s330 = sand.u32 %s110, 1
          %s331 = smul.addr %s330, 16
          %s332 = scalar_lea.vmem [#allocation3], %s331
          %333 = dma.done %s329, 256
        $region85: #{tpu_custom_call.1} parent=80 // pred_fallthru
          _
      $region81: #{tpu_custom_call.1} parent=5 // pred_fallthru
        _
    $region6: #{tpu_custom_call.1} parent=1 // loop_footer
      %s16 = sadd.s32 1, %s12
    $region7: #{tpu_custom_call.1} parent=1 // loop_footer_branch
      %11 = sbr.rel target = $region3
    $region8: #{tpu_custom_call.1} parent=1 // loop_exit
      _
    %334 = vsyncpa [#allocation4], 1
    %s335 = scalar_lea.sflag [#allocation4], 1
    %336 = vsyncpa %s335, 1

</llo_original>
